<compile_context>
chip_gen: v6e
topology: v6e:2x2x1
jax: 0.10.0
libtpu: 0.0.40
codegen_flags: <defaults>
</compile_context>

<pallas_src>
import math
from functools import partial

import jax
import jax.numpy as jnp
from jax.experimental import pallas as pl
from jax.experimental.pallas import tpu as pltpu

# SELU constants (match torch.nn.SELU defaults exactly)
_SELU_ALPHA = 1.6732632423543772
_SELU_SCALE = 1.0507009873554805

_LANE = 128     # last-dim (lane) granularity
_SUBLANE = 8    # second-to-last dim (sublane) granularity


def _round_up(x: int, m: int) -> int:
    return (x + m - 1) // m * m


def _cdiv(a: int, b: int) -> int:
    return (a + b - 1) // b


def _selu(y):
    # scale * (y if y > 0 else alpha * (exp(y) - 1)); clamp the exp argument so
    # the discarded branch never produces inf.  Kept in f32 on purpose.
    return _SELU_SCALE * jnp.where(
        y > 0.0, y, _SELU_ALPHA * (jnp.exp(jnp.minimum(y, 0.0)) - 1.0))


def _fused_mlp_kernel(*refs, num_layers: int):
    """Fused MLP: o = SELU(... SELU(SELU(x @ W0 + b0) @ W1 + b1) ...).

    refs layout: x_ref, (w0, b0, w1, b1, ..., w_{L-1}, b_{L-1}), o_ref
      x_ref : [TM, Pin0]       f32 batch tile of zero-padded activations
      w_l   : [Pin_l, Pout_l]  bf16 zero-padded, pre-transposed weights (resident)
      b_l   : [1, Pout_l]      f32 zero-padded biases (resident)
      o_ref : [TM, Pout_last]  f32 batch tile of zero-padded outputs
    """
    x_ref, o_ref = refs[0], refs[-1]
    wb = refs[1:-1]

    h = x_ref[...]  # f32
    # Static unroll over layers (per-layer shapes are heterogeneous, so no
    # dynamic indexing over a stacked cube).  Intermediates stay in vregs/VMEM.
    # TODO(synk): for deep MLPs (L > ~6) with uniform widths, switch to a
    # lax.fori_loop over a stacked weight cube to bound live ranges.
    for l in range(num_layers):
        w = wb[2 * l][...]        # bf16 (Pin_l, Pout_l)
        b = wb[2 * l + 1][...]    # f32  (1, Pout_l)
        y = jnp.dot(h.astype(jnp.bfloat16), w,
                    preferred_element_type=jnp.float32) + b
        h = _selu(y)              # SELU(0) == 0 -> padded lanes stay exact zeros
    o_ref[...] = h.astype(o_ref.dtype)
    # TODO(synk): AlphaDropout is identity at inference (eval mode); training-mode
    # alpha-dropout masking/affine correction is not implemented here.


def prepare_mlp_params(params):
    """One-time host-side prep (hoisted out of the per-call path):
    per-layer zero-padding to (Pin_l, Pout_l) multiples of 128 and bf16 cast
    of the weights.  Biases stay f32 (added post-accumulation).

    params : list of (w_t [in_f, out_f] f32, b [out_f] f32), weights already
             transposed from torch's [out_f, in_f].
    """
    feats = [params[0][0].shape[0]] + [w_t.shape[1] for w_t, _ in params]
    pads = [_round_up(f, _LANE) for f in feats]
    w_pads, b_pads = [], []
    for l, (w_t, b) in enumerate(params):
        in_f, out_f = w_t.shape
        pin, pout = pads[l], pads[l + 1]
        w_p = jnp.zeros((pin, pout), jnp.bfloat16).at[:in_f, :out_f].set(
            w_t.astype(jnp.bfloat16))
        b_p = jnp.zeros((1, pout), jnp.float32).at[0, :out_f].set(b)
        w_pads.append(w_p)
        b_pads.append(b_p)
    return {"w": w_pads, "b": b_pads, "feats": feats, "pads": pads}


def _resident_spec(shape):
    """Constant-index, VMEM-resident operand; single-buffered (it never
    changes across grid steps, so double-buffering is wasted VMEM)."""
    idx_map = lambda i: (0,) * len(shape)
    try:
        return pl.BlockSpec(shape, idx_map, pipeline_mode=pl.Buffered(1))
    except TypeError:  # older jax without pipeline_mode kwarg
        return pl.BlockSpec(shape, idx_map)


def mlp_forward(x: jax.Array, prepared) -> jax.Array:
    """Full MLP forward in a single Pallas kernel.

    x        : [B, in_features] float32
    prepared : output of prepare_mlp_params()
    """
    w_pads, b_pads = prepared["w"], prepared["b"]
    feats, pads = prepared["feats"], prepared["pads"]
    L = len(w_pads)
    B, in_features = x.shape
    assert in_features == feats[0]
    out_features = feats[-1]
    pin0, pout_last = pads[0], pads[-1]

    # Batch tile: sublane-aligned, capped at 256 rows; for larger batches make
    # at least 2 grid steps so the "parallel" axis feeds both v7x TensorCores
    # and the activation DMA pipeline has something to overlap.
    bs = _round_up(B, _SUBLANE)
    if bs <= 2 * _SUBLANE:
        tm = bs
    else:
        tm = min(_round_up(_cdiv(bs, 2), _SUBLANE), 256)
    bp = _round_up(bs, tm)

    # Zero-pad input activations (lane-dense; exact under zero-padded weights
    # and SELU(0)==0).  Padded batch rows are wasted work, sliced off below.
    x_pad = jnp.pad(x.astype(jnp.float32),
                    ((0, bp - B), (0, pin0 - in_features)))

    # VMEM budget from the actual footprint: single-buffered weights/biases,
    # double-buffered activation tiles, headroom for intermediates.  Clamped
    # so the plan stays viable on v7x's 64 MiB physical VMEM.
    w_bytes = sum(int(w.size) * 2 for w in w_pads)           # bf16
    b_bytes = sum(int(b.size) * 4 for b in b_pads)           # f32
    act_bytes = 2 * tm * pin0 * 4 + 2 * tm * pout_last * 4   # in/out double-buffers
    inter_bytes = 4 * tm * max(pads) * 4                     # live intermediates
    vmem_limit = min(max(w_bytes + b_bytes + act_bytes + inter_bytes + (8 << 20),
                         32 << 20), 96 << 20)

    in_specs = [pl.BlockSpec((tm, pin0), lambda i: (i, 0))]  # batch-tiled input
    operands = [x_pad]
    for w_p, b_p in zip(w_pads, b_pads):
        in_specs.append(_resident_spec(w_p.shape))
        in_specs.append(_resident_spec(b_p.shape))
        operands.append(w_p)
        operands.append(b_p)

    out_pad = pl.pallas_call(
        partial(_fused_mlp_kernel, num_layers=L),
        out_shape=jax.ShapeDtypeStruct((bp, pout_last), jnp.float32),
        grid=(bp // tm,),
        in_specs=in_specs,
        out_specs=pl.BlockSpec((tm, pout_last), lambda i: (i, 0)),
        compiler_params=pltpu.CompilerParams(
            dimension_semantics=("parallel",),   # megacore-shardable batch axis
            vmem_limit_bytes=int(vmem_limit),
        ),
    )(*operands)

    return out_pad[:B, :out_features]


def init_mlp_params(key, in_features, hidden_layer_sizes, out_features):
    """Deterministic parameter init mirroring the torch module:
    xavier_uniform_ for weights, default torch Linear uniform for bias."""
    fs = [in_features, *hidden_layer_sizes, out_features]
    params = []
    for in_f, out_f in zip(fs, fs[1:]):
        key, kw, kb = jax.random.split(key, 3)
        # xavier_uniform on torch weight of shape (out_f, in_f):
        # bound = sqrt(6 / (fan_in + fan_out)) = sqrt(6 / (in_f + out_f))
        wbound = math.sqrt(6.0 / (in_f + out_f))
        w = jax.random.uniform(kw, (out_f, in_f), jnp.float32, -wbound, wbound)
        # torch Linear default bias init: U(-1/sqrt(in_f), 1/sqrt(in_f))
        bbound = 1.0 / math.sqrt(in_f)
        b = jax.random.uniform(kb, (out_f,), jnp.float32, -bbound, bbound)
        params.append((jnp.asarray(w.T), jnp.asarray(b)))  # store transposed weight
    return params


if __name__ == "__main__":
    key = jax.random.PRNGKey(0)
    k_x, k_p = jax.random.split(key)

    batch = 8
    in_features = 16
    hidden_layer_sizes = [32, 32]
    out_features = 8
    dropout_p = 0.0  # AlphaDropout is identity at inference anyway

    x = jax.random.normal(k_x, (batch, in_features), dtype=jnp.float32)
    params = init_mlp_params(k_p, in_features, hidden_layer_sizes, out_features)
    prepared = prepare_mlp_params(params)   # one-time padding + bf16 cast

    out = mlp_forward(x, prepared)
    jax.block_until_ready(out)

    # sanity check against a plain-JAX f32 reference of the same forward pass
    def ref_forward(x, params):
        h = x
        for w_t, b in params:
            y = h @ w_t + b
            h = _SELU_SCALE * jnp.where(y > 0.0, y, _SELU_ALPHA * (jnp.exp(y) - 1.0))
        return h

    ref = ref_forward(x, params)
    assert out.shape == (batch, out_features)
    # bf16 MXU operands (f32 accumulation) -> slightly looser tolerance than f32
    assert jnp.allclose(out, ref, atol=3e-2, rtol=3e-2), \
        float(jnp.max(jnp.abs(out - ref)))

    print("KERNEL_OK")
</pallas_src>

<mosaic_0001>
module attributes {stable_mosaic.version = 11 : i64} {
  func.func @_fused_mlp_kernel(%arg0: i32, %arg1: memref<8x128xf32, #tpu.memory_space<vmem>>, %arg2: memref<128x128xbf16, #tpu.memory_space<vmem>>, %arg3: memref<1x128xf32, #tpu.memory_space<vmem>>, %arg4: memref<128x128xbf16, #tpu.memory_space<vmem>>, %arg5: memref<1x128xf32, #tpu.memory_space<vmem>>, %arg6: memref<128x128xbf16, #tpu.memory_space<vmem>>, %arg7: memref<1x128xf32, #tpu.memory_space<vmem>>, %arg8: memref<8x128xf32, #tpu.memory_space<vmem>>) attributes {dimension_semantics = [#tpu.dimension_semantics<parallel>], iteration_bounds = array<i64: 1>, scalar_prefetch = 0 : i64, scratch_operands = 0 : i64, tpu.core_type = #tpu.core_type<tc>, window_params = [{transform_indices = @transform_0, window_bounds = array<i64: 8, 128>}, {pipeline_mode = #tpu.pipeline_mode<synchronous>, transform_indices = @transform_1, window_bounds = array<i64: 128, 128>}, {pipeline_mode = #tpu.pipeline_mode<synchronous>, transform_indices = @transform_2, window_bounds = array<i64: 1, 128>}, {pipeline_mode = #tpu.pipeline_mode<synchronous>, transform_indices = @transform_3, window_bounds = array<i64: 128, 128>}, {pipeline_mode = #tpu.pipeline_mode<synchronous>, transform_indices = @transform_4, window_bounds = array<i64: 1, 128>}, {pipeline_mode = #tpu.pipeline_mode<synchronous>, transform_indices = @transform_5, window_bounds = array<i64: 128, 128>}, {pipeline_mode = #tpu.pipeline_mode<synchronous>, transform_indices = @transform_6, window_bounds = array<i64: 1, 128>}, {transform_indices = @transform_7, window_bounds = array<i64: 8, 128>}]} {
    %c0 = arith.constant 0 : index
    %c0_0 = arith.constant 0 : index
    %0 = vector.load %arg1[%c0, %c0_0] : memref<8x128xf32, #tpu.memory_space<vmem>>, vector<8x128xf32>
    %c0_1 = arith.constant 0 : index
    %c0_2 = arith.constant 0 : index
    %1 = vector.load %arg2[%c0_1, %c0_2] : memref<128x128xbf16, #tpu.memory_space<vmem>>, vector<128x128xbf16>
    %c0_3 = arith.constant 0 : index
    %c0_4 = arith.constant 0 : index
    %2 = vector.load %arg3[%c0_3, %c0_4] : memref<1x128xf32, #tpu.memory_space<vmem>>, vector<1x128xf32>
    %3 = arith.truncf %0 : vector<8x128xf32> to vector<8x128xbf16>
    %cst = arith.constant dense<0.000000e+00> : vector<8x128xf32>
    %4 = tpu.matmul %3, %1, %cst {dimension_numbers = #tpu.dot_dimension_numbers<[1], [0], [0], [1], [0, 0, 1, 1], [], []>} : vector<8x128xbf16>, vector<128x128xbf16>, vector<8x128xf32> -> vector<8x128xf32>
    %5 = vector.broadcast %2 : vector<1x128xf32> to vector<8x128xf32>
    %6 = arith.addf %4, %5 : vector<8x128xf32>
    %cst_5 = arith.constant 0.000000e+00 : f32
    %7 = vector.broadcast %cst_5 : f32 to vector<8x128xf32>
    %8 = arith.cmpf ogt, %6, %7 : vector<8x128xf32>
    %cst_6 = arith.constant 0.000000e+00 : f32
    %9 = vector.broadcast %cst_6 : f32 to vector<8x128xf32>
    %10 = arith.minimumf %6, %9 : vector<8x128xf32>
    %11 = math.exp %10 : vector<8x128xf32>
    %cst_7 = arith.constant 1.000000e+00 : f32
    %12 = vector.broadcast %cst_7 : f32 to vector<8x128xf32>
    %13 = arith.subf %11, %12 : vector<8x128xf32>
    %cst_8 = arith.constant 1.67326319 : f32
    %14 = vector.broadcast %cst_8 : f32 to vector<8x128xf32>
    %15 = arith.mulf %14, %13 : vector<8x128xf32>
    %16 = arith.select %8, %6, %15 : vector<8x128xi1>, vector<8x128xf32>
    %cst_9 = arith.constant 1.05070102 : f32
    %17 = vector.broadcast %cst_9 : f32 to vector<8x128xf32>
    %18 = arith.mulf %17, %16 : vector<8x128xf32>
    %c0_10 = arith.constant 0 : index
    %c0_11 = arith.constant 0 : index
    %19 = vector.load %arg4[%c0_10, %c0_11] : memref<128x128xbf16, #tpu.memory_space<vmem>>, vector<128x128xbf16>
    %c0_12 = arith.constant 0 : index
    %c0_13 = arith.constant 0 : index
    %20 = vector.load %arg5[%c0_12, %c0_13] : memref<1x128xf32, #tpu.memory_space<vmem>>, vector<1x128xf32>
    %21 = arith.truncf %18 : vector<8x128xf32> to vector<8x128xbf16>
    %cst_14 = arith.constant dense<0.000000e+00> : vector<8x128xf32>
    %22 = tpu.matmul %21, %19, %cst_14 {dimension_numbers = #tpu.dot_dimension_numbers<[1], [0], [0], [1], [0, 0, 1, 1], [], []>} : vector<8x128xbf16>, vector<128x128xbf16>, vector<8x128xf32> -> vector<8x128xf32>
    %23 = vector.broadcast %20 : vector<1x128xf32> to vector<8x128xf32>
    %24 = arith.addf %22, %23 : vector<8x128xf32>
    %cst_15 = arith.constant 0.000000e+00 : f32
    %25 = vector.broadcast %cst_15 : f32 to vector<8x128xf32>
    %26 = arith.cmpf ogt, %24, %25 : vector<8x128xf32>
    %cst_16 = arith.constant 0.000000e+00 : f32
    %27 = vector.broadcast %cst_16 : f32 to vector<8x128xf32>
    %28 = arith.minimumf %24, %27 : vector<8x128xf32>
    %29 = math.exp %28 : vector<8x128xf32>
    %cst_17 = arith.constant 1.000000e+00 : f32
    %30 = vector.broadcast %cst_17 : f32 to vector<8x128xf32>
    %31 = arith.subf %29, %30 : vector<8x128xf32>
    %cst_18 = arith.constant 1.67326319 : f32
    %32 = vector.broadcast %cst_18 : f32 to vector<8x128xf32>
    %33 = arith.mulf %32, %31 : vector<8x128xf32>
    %34 = arith.select %26, %24, %33 : vector<8x128xi1>, vector<8x128xf32>
    %cst_19 = arith.constant 1.05070102 : f32
    %35 = vector.broadcast %cst_19 : f32 to vector<8x128xf32>
    %36 = arith.mulf %35, %34 : vector<8x128xf32>
    %c0_20 = arith.constant 0 : index
    %c0_21 = arith.constant 0 : index
    %37 = vector.load %arg6[%c0_20, %c0_21] : memref<128x128xbf16, #tpu.memory_space<vmem>>, vector<128x128xbf16>
    %c0_22 = arith.constant 0 : index
    %c0_23 = arith.constant 0 : index
    %38 = vector.load %arg7[%c0_22, %c0_23] : memref<1x128xf32, #tpu.memory_space<vmem>>, vector<1x128xf32>
    %39 = arith.truncf %36 : vector<8x128xf32> to vector<8x128xbf16>
    %cst_24 = arith.constant dense<0.000000e+00> : vector<8x128xf32>
    %40 = tpu.matmul %39, %37, %cst_24 {dimension_numbers = #tpu.dot_dimension_numbers<[1], [0], [0], [1], [0, 0, 1, 1], [], []>} : vector<8x128xbf16>, vector<128x128xbf16>, vector<8x128xf32> -> vector<8x128xf32>
    %41 = vector.broadcast %38 : vector<1x128xf32> to vector<8x128xf32>
    %42 = arith.addf %40, %41 : vector<8x128xf32>
    %cst_25 = arith.constant 0.000000e+00 : f32
    %43 = vector.broadcast %cst_25 : f32 to vector<8x128xf32>
    %44 = arith.cmpf ogt, %42, %43 : vector<8x128xf32>
    %cst_26 = arith.constant 0.000000e+00 : f32
    %45 = vector.broadcast %cst_26 : f32 to vector<8x128xf32>
    %46 = arith.minimumf %42, %45 : vector<8x128xf32>
    %47 = math.exp %46 : vector<8x128xf32>
    %cst_27 = arith.constant 1.000000e+00 : f32
    %48 = vector.broadcast %cst_27 : f32 to vector<8x128xf32>
    %49 = arith.subf %47, %48 : vector<8x128xf32>
    %cst_28 = arith.constant 1.67326319 : f32
    %50 = vector.broadcast %cst_28 : f32 to vector<8x128xf32>
    %51 = arith.mulf %50, %49 : vector<8x128xf32>
    %52 = arith.select %44, %42, %51 : vector<8x128xi1>, vector<8x128xf32>
    %cst_29 = arith.constant 1.05070102 : f32
    %53 = vector.broadcast %cst_29 : f32 to vector<8x128xf32>
    %54 = arith.mulf %53, %52 : vector<8x128xf32>
    %c0_30 = arith.constant 0 : index
    %c0_31 = arith.constant 0 : index
    %55 = vector.load %arg8[%c0_30, %c0_31] : memref<8x128xf32, #tpu.memory_space<vmem>>, vector<8x128xf32>
    tpu.vector_store %arg8[%c0_30, %c0_31], %54 {strides = array<i32>} : memref<8x128xf32, #tpu.memory_space<vmem>>, vector<8x128xf32>,
    return
  }
  func.func @transform_0(%arg0: i32) -> (i32, i32) {
    %c0_i32 = arith.constant 0 : i32
    %c0_i32_0 = arith.constant 0 : i32
    return %arg0, %c0_i32 : i32, i32
  }
  func.func @transform_1(%arg0: i32) -> (i32, i32) {
    %c0_i32 = arith.constant 0 : i32
    %c0_i32_0 = arith.constant 0 : i32
    %c0_i32_1 = arith.constant 0 : i32
    return %c0_i32, %c0_i32_0 : i32, i32
  }
  func.func @transform_2(%arg0: i32) -> (i32, i32) {
    %c0_i32 = arith.constant 0 : i32
    %c0_i32_0 = arith.constant 0 : i32
    %c0_i32_1 = arith.constant 0 : i32
    return %c0_i32, %c0_i32_0 : i32, i32
  }
  func.func @transform_3(%arg0: i32) -> (i32, i32) {
    %c0_i32 = arith.constant 0 : i32
    %c0_i32_0 = arith.constant 0 : i32
    %c0_i32_1 = arith.constant 0 : i32
    return %c0_i32, %c0_i32_0 : i32, i32
  }
  func.func @transform_4(%arg0: i32) -> (i32, i32) {
    %c0_i32 = arith.constant 0 : i32
    %c0_i32_0 = arith.constant 0 : i32
    %c0_i32_1 = arith.constant 0 : i32
    return %c0_i32, %c0_i32_0 : i32, i32
  }
  func.func @transform_5(%arg0: i32) -> (i32, i32) {
    %c0_i32 = arith.constant 0 : i32
    %c0_i32_0 = arith.constant 0 : i32
    %c0_i32_1 = arith.constant 0 : i32
    return %c0_i32, %c0_i32_0 : i32, i32
  }
  func.func @transform_6(%arg0: i32) -> (i32, i32) {
    %c0_i32 = arith.constant 0 : i32
    %c0_i32_0 = arith.constant 0 : i32
    %c0_i32_1 = arith.constant 0 : i32
    return %c0_i32, %c0_i32_0 : i32, i32
  }
  func.func @transform_7(%arg0: i32) -> (i32, i32) {
    %c0_i32 = arith.constant 0 : i32
    %c0_i32_0 = arith.constant 0 : i32
    return %arg0, %c0_i32 : i32, i32
  }
}

</mosaic_0001>

<llo_original>
// kernel: tpu_custom_call.1
$region0: #{tpu_custom_call.1}
  #allocation0 [shape = 'u32[]', space=smem, size = 0x4, offset = 0x4, fixed_abs, tag = 'smem constant byte address 0x4 - core index']
  #allocation1 [shape = 'u32[144,128]{1,0:T(1,128)}', space=vmem, size = 0x12000, scoped, tag = 'internal scratch']
  %s0 = inlined_call_operand.hbm [shape: f32[8,128], index: 0, kind: input, shape index: {}]
  %s1 = inlined_call_operand.hbm [shape: bf16[128,128], index: 1, kind: input, shape index: {}]
  %s2 = inlined_call_operand.vmem [shape: f32[1,128], index: 2, kind: input, shape index: {}]
  %s3 = inlined_call_operand.hbm [shape: bf16[128,128], index: 3, kind: input, shape index: {}]
  %s4 = inlined_call_operand.vmem [shape: f32[1,128], index: 4, kind: input, shape index: {}]
  %s5 = inlined_call_operand.hbm [shape: bf16[128,128], index: 5, kind: input, shape index: {}]
  %s6 = inlined_call_operand.vmem [shape: f32[1,128], index: 6, kind: input, shape index: {}]
  %s7 = inlined_call_operand.hbm [shape: f32[8,128], index: 7, kind: output, shape index: {}]
  %s8 = sld [smem:[#allocation0]]
  $region54: #{tpu_custom_call.1} parent=0
    _
  %s10 = ssub.s32 1, %s8
  %s11 = scalar_select 0, %s10, %s8
  $region1: #{tpu_custom_call.1} parent=0
    #allocation2 [shape = 'u8[4096]{0}', space=vmem, size = 0x1000, scoped, tag = 'input window, operand 0, single buffered']
    #allocation3 [shape = 's32[1]{0}', space=sflag, size = 0x4, scoped, tag = 'scoped memory for tpu_custom_call.1']
    #allocation4 [shape = 's32[1]{0}', space=sflag, size = 0x4, scoped, tag = 'scoped memory for tpu_custom_call.1']
    #allocation5 [shape = 'u8[32768]{0}', space=vmem, size = 0x8000, scoped, tag = 'input window, operand 1, single buffered']
    #allocation6 [shape = 's32[1]{0}', space=sflag, size = 0x4, scoped, tag = 'scoped memory for tpu_custom_call.1']
    #allocation7 [shape = 'u8[32768]{0}', space=vmem, size = 0x8000, scoped, tag = 'input window, operand 3, single buffered']
    #allocation8 [shape = 'u8[32768]{0}', space=vmem, size = 0x8000, scoped, tag = 'input window, operand 5, single buffered']
    #allocation9 [shape = 's32[1]{0}', space=sflag, size = 0x4, scoped, tag = 'scoped memory for tpu_custom_call.1']
    #allocation10 [shape = 'u8[4096]{0}', space=vmem, size = 0x1000, scoped, tag = 'output window, operand 0, single buffered']
    %12 = vsyncpa [#allocation3], 0
    %13 = vsyncpa [#allocation6], 0
    %14 = vsyncpa [#allocation9], 0
    %15 = vsyncpa [#allocation4], 0
    // Predicated region
    $region2: #{tpu_custom_call.1} parent=1 // pred_check
      _
    $region3: #{tpu_custom_call.1} parent=1 // pred_check_branch
      %17 = sbr.rel (0) target = $region5
    $region4: #{tpu_custom_call.1} parent=1 // pred_region
      %s19 = ssub.s32 128, 128
      %20 = vsyncadd [#allocation3], %s19
      %s22 = sshll.u32 [#allocation2], 4
      %s23 = int_to_ptr.vmem [resolvable:$true] %s22
      %25 = dma.hbm_to_vmem [thread:$0]  %s0, 128, %s23, [#allocation3]
    $region5: #{tpu_custom_call.1} parent=1 // pred_fallthru
      _
    // Predicated region
    $region6: #{tpu_custom_call.1} parent=1 // pred_check
      _
    $region7: #{tpu_custom_call.1} parent=1 // pred_check_branch
      %27 = sbr.rel (0) target = $region9
    $region8: #{tpu_custom_call.1} parent=1 // pred_region
      %s29 = ssub.s32 1024, 1024
      %30 = vsyncadd [#allocation6], %s29
      %s31 = sshll.u32 [#allocation5], 4
      %s32 = int_to_ptr.vmem [resolvable:$true] %s31
      %37 = dma.hbm_to_vmem [thread:$0]  %s1, 1024, %s32, [#allocation6], 64, 64, 4
    $region9: #{tpu_custom_call.1} parent=1 // pred_fallthru
      _
    // Predicated region
    $region10: #{tpu_custom_call.1} parent=1 // pred_check
      _
    $region11: #{tpu_custom_call.1} parent=1 // pred_check_branch
      %39 = sbr.rel (0) target = $region13
    $region12: #{tpu_custom_call.1} parent=1 // pred_region
      _
    $region13: #{tpu_custom_call.1} parent=1 // pred_fallthru
      _
    // Predicated region
    $region14: #{tpu_custom_call.1} parent=1 // pred_check
      _
    $region15: #{tpu_custom_call.1} parent=1 // pred_check_branch
      %41 = sbr.rel (0) target = $region17
    $region16: #{tpu_custom_call.1} parent=1 // pred_region
      %s43 = ssub.s32 1024, 1024
      %44 = vsyncadd [#allocation6], %s43
      %s45 = sshll.u32 [#allocation7], 4
      %s46 = int_to_ptr.vmem [resolvable:$true] %s45
      %51 = dma.hbm_to_vmem [thread:$0]  %s3, 1024, %s46, [#allocation6], 64, 64, 4
    $region17: #{tpu_custom_call.1} parent=1 // pred_fallthru
      _
    // Predicated region
    $region18: #{tpu_custom_call.1} parent=1 // pred_check
      _
    $region19: #{tpu_custom_call.1} parent=1 // pred_check_branch
      %53 = sbr.rel (0) target = $region21
    $region20: #{tpu_custom_call.1} parent=1 // pred_region
      _
    $region21: #{tpu_custom_call.1} parent=1 // pred_fallthru
      _
    // Predicated region
    $region22: #{tpu_custom_call.1} parent=1 // pred_check
      _
    $region23: #{tpu_custom_call.1} parent=1 // pred_check_branch
      %55 = sbr.rel (0) target = $region25
    $region24: #{tpu_custom_call.1} parent=1 // pred_region
      %s57 = ssub.s32 1024, 1024
      %58 = vsyncadd [#allocation9], %s57
      %s59 = sshll.u32 [#allocation8], 4
      %s60 = int_to_ptr.vmem [resolvable:$true] %s59
      %65 = dma.hbm_to_vmem [thread:$0]  %s5, 1024, %s60, [#allocation9], 64, 64, 4
    $region25: #{tpu_custom_call.1} parent=1 // pred_fallthru
      _
    // Predicated region
    $region26: #{tpu_custom_call.1} parent=1 // pred_check
      _
    $region27: #{tpu_custom_call.1} parent=1 // pred_check_branch
      %67 = sbr.rel (0) target = $region29
    $region28: #{tpu_custom_call.1} parent=1 // pred_region
      _
    $region29: #{tpu_custom_call.1} parent=1 // pred_fallthru
      _
    // Predicated region
    $region30: #{tpu_custom_call.1} parent=1 // pred_check
      _
    $region31: #{tpu_custom_call.1} parent=1 // pred_check_branch
      %69 = sbr.rel (0) target = $region33
    $region32: #{tpu_custom_call.1} parent=1 // pred_region
      %70 = dma.done [#allocation3], 128
    $region33: #{tpu_custom_call.1} parent=1 // pred_fallthru
      _
    // Predicated region
    $region34: #{tpu_custom_call.1} parent=1 // pred_check
      _
    $region35: #{tpu_custom_call.1} parent=1 // pred_check_branch
      %72 = sbr.rel (0) target = $region37
    $region36: #{tpu_custom_call.1} parent=1 // pred_region
      %73 = dma.done [#allocation6], 1024
    $region37: #{tpu_custom_call.1} parent=1 // pred_fallthru
      _
    // Predicated region
    $region38: #{tpu_custom_call.1} parent=1 // pred_check
      _
    $region39: #{tpu_custom_call.1} parent=1 // pred_check_branch
      %75 = sbr.rel (0) target = $region41
    $region40: #{tpu_custom_call.1} parent=1 // pred_region
      %76 = dma.done [#allocation6], 1024
    $region41: #{tpu_custom_call.1} parent=1 // pred_fallthru
      _
    // Predicated region
    $region42: #{tpu_custom_call.1} parent=1 // pred_check
      _
    $region43: #{tpu_custom_call.1} parent=1 // pred_check_branch
      %78 = sbr.rel (0) target = $region45
    $region44: #{tpu_custom_call.1} parent=1 // pred_region
      %79 = dma.done [#allocation9], 1024
    $region45: #{tpu_custom_call.1} parent=1 // pred_fallthru
      _
    %v81 = vld [vmem:[#allocation2] sm:$0xff]
    %v82 = vld [vmem:[#allocation5] sm:$0xf]
    %v83 = vld [vmem:[#allocation5 + $0x4] sm:$0xf]
    %v84 = vld [vmem:[#allocation5 + $0x8] sm:$0xf]
    %v85 = vld [vmem:[#allocation5 + $0xc] sm:$0xf]
    %v86 = vld [vmem:[#allocation5 + $0x10] sm:$0xf]
    %v87 = vld [vmem:[#allocation5 + $0x14] sm:$0xf]
    %v88 = vld [vmem:[#allocation5 + $0x18] sm:$0xf]
    %v89 = vld [vmem:[#allocation5 + $0x1c] sm:$0xf]
    %v90 = vld [vmem:[#allocation5 + $0x20] sm:$0xf]
    %v91 = vld [vmem:[#allocation5 + $0x24] sm:$0xf]
    %v92 = vld [vmem:[#allocation5 + $0x28] sm:$0xf]
    %v93 = vld [vmem:[#allocation5 + $0x2c] sm:$0xf]
    %v94 = vld [vmem:[#allocation5 + $0x30] sm:$0xf]
    %v95 = vld [vmem:[#allocation5 + $0x34] sm:$0xf]
    %v96 = vld [vmem:[#allocation5 + $0x38] sm:$0xf]
    %v97 = vld [vmem:[#allocation5 + $0x3c] sm:$0xf]
    %v98 = vld [vmem:[%s2] sm:$0x1]
    %v99 = vpack.c.bf16 %v81, %v81
    %v101 = vlaneseq
    %v102 = vshrl.u32 %v101, 7
    %v103 = vsub.s32 0, %v102
    %v104 = vrot.slane %v98, %v103
    %v122 = vunpack.c.l.b16 %v82
    %v123 = vunpack.c.l.b16 %v83
    %v124 = vunpack.c.l.b16 %v84
    %v125 = vunpack.c.l.b16 %v85
    %v126 = vunpack.c.l.b16 %v86
    %v127 = vunpack.c.l.b16 %v87
    %v128 = vunpack.c.l.b16 %v88
    %v129 = vunpack.c.l.b16 %v89
    %v130 = vunpack.c.l.b16 %v90
    %v131 = vunpack.c.l.b16 %v91
    %v132 = vunpack.c.l.b16 %v92
    %v133 = vunpack.c.l.b16 %v93
    %v134 = vunpack.c.l.b16 %v94
    %v135 = vunpack.c.l.b16 %v95
    %v136 = vunpack.c.l.b16 %v96
    %v137 = vunpack.c.l.b16 %v97
    %v138 = vpack.c.b16 %v123, %v122
    %v139 = vpack.c.b16 %v125, %v124
    %v140 = vpack.c.b16 %v127, %v126
    %v141 = vpack.c.b16 %v129, %v128
    %v142 = vpack.c.b16 %v131, %v130
    %v143 = vpack.c.b16 %v133, %v132
    %v144 = vpack.c.b16 %v135, %v134
    %v145 = vpack.c.b16 %v137, %v136
    %154 = vmatprep.subr.bf16.mxu0 0
    %155 = vmatpush1.bf16.msra.mxu0 %v145
    %156 = vmatprep.subr.bf16.mxu0 0
    %157 = vmatpush1.bf16.msra.mxu0 %v144
    %158 = vmatprep.subr.bf16.mxu0 0
    %159 = vmatpush1.bf16.msra.mxu0 %v143
    %160 = vmatprep.subr.bf16.mxu0 0
    %161 = vmatpush1.bf16.msra.mxu0 %v142
    %162 = vmatprep.subr.bf16.mxu0 0
    %163 = vmatpush1.bf16.msra.mxu0 %v141
    %164 = vmatprep.subr.bf16.mxu0 0
    %165 = vmatpush1.bf16.msra.mxu0 %v140
    %166 = vmatprep.subr.bf16.mxu0 0
    %167 = vmatpush1.bf16.msra.mxu0 %v139
    %168 = vmatprep.subr.bf16.mxu0 0
    %169 = vmatpush1.bf16.msra.mxu0 %v138
    %170 = vmatprep.subr.bf16.mxu0 0
    %171 = vmatpush2.bf16.msra.mxu0 0
    %172 = vmatprep.subr.bf16.mxu0 0
    %173 = vmatpush2.bf16.msra.mxu0 0
    %174 = vmatprep.subr.bf16.mxu0 0
    %175 = vmatpush2.bf16.msra.mxu0 0
    %176 = vmatprep.subr.bf16.mxu0 0
    %177 = vmatpush2.bf16.msra.mxu0 0
    %178 = vmatprep.subr.bf16.mxu0 0
    %179 = vmatpush2.bf16.msra.mxu0 0
    %180 = vmatprep.subr.bf16.mxu0 0
    %181 = vmatpush2.bf16.msra.mxu0 0
    %182 = vmatprep.subr.bf16.mxu0 0
    %183 = vmatpush2.bf16.msra.mxu0 0
    %184 = vmatprep.subr.bf16.mxu0 0
    %185 = vmatpush2.bf16.msra.mxu0 0
    %186 = vmatprep.mubr.bf16.mxu0 0
    %187 = vmatmul.mubr.bf16.gmra.mxu0 %v99
    %v188 = vpop.f32.mrf.mxu0
    %v189 = vadd.f32 %v104, %v188
    %v190 = vpop.f32.mrf.mxu0
    %v191 = vpop.f32.mrf.mxu0
    %v192 = vpop.f32.mrf.mxu0
    %193 = vdwg.mxu0
    %vm194 = vcmp.gt.f32.partialorder %v189, 0.0
    %v195 = vmin.f32 %v189, 0.0
    %v196 = vmul.f32 %v195, 1.442695
    %v197 = vpow.pop %v196
    %v198 = vsub.f32 %v197, 1.0
    %v199 = vmul.f32 %v198, 1.6732632
    %v200 = vsel %vm194, %v189, %v199
    %v201 = vmul.f32 %v200, 1.050701
    %v202 = vld [vmem:[#allocation7] sm:$0xf]
    %v203 = vld [vmem:[#allocation7 + $0x4] sm:$0xf]
    %v204 = vld [vmem:[#allocation7 + $0x8] sm:$0xf]
    %v205 = vld [vmem:[#allocation7 + $0xc] sm:$0xf]
    %v206 = vld [vmem:[#allocation7 + $0x10] sm:$0xf]
    %v207 = vld [vmem:[#allocation7 + $0x14] sm:$0xf]
    %v208 = vld [vmem:[#allocation7 + $0x18] sm:$0xf]
    %v209 = vld [vmem:[#allocation7 + $0x1c] sm:$0xf]
    %v210 = vld [vmem:[#allocation7 + $0x20] sm:$0xf]
    %v211 = vld [vmem:[#allocation7 + $0x24] sm:$0xf]
    %v212 = vld [vmem:[#allocation7 + $0x28] sm:$0xf]
    %v213 = vld [vmem:[#allocation7 + $0x2c] sm:$0xf]
    %v214 = vld [vmem:[#allocation7 + $0x30] sm:$0xf]
    %v215 = vld [vmem:[#allocation7 + $0x34] sm:$0xf]
    %v216 = vld [vmem:[#allocation7 + $0x38] sm:$0xf]
    %v217 = vld [vmem:[#allocation7 + $0x3c] sm:$0xf]
    %v218 = vld [vmem:[%s4] sm:$0x1]
    %v219 = vpack.c.bf16 %v201, %v201
    %v221 = vlaneseq
    %v222 = vshrl.u32 %v221, 7
    %v223 = vsub.s32 0, %v222
    %v224 = vrot.slane %v218, %v223
    %v242 = vunpack.c.l.b16 %v202
    %v243 = vunpack.c.l.b16 %v203
    %v244 = vunpack.c.l.b16 %v204
    %v245 = vunpack.c.l.b16 %v205
    %v246 = vunpack.c.l.b16 %v206
    %v247 = vunpack.c.l.b16 %v207
    %v248 = vunpack.c.l.b16 %v208
    %v249 = vunpack.c.l.b16 %v209
    %v250 = vunpack.c.l.b16 %v210
    %v251 = vunpack.c.l.b16 %v211
    %v252 = vunpack.c.l.b16 %v212
    %v253 = vunpack.c.l.b16 %v213
    %v254 = vunpack.c.l.b16 %v214
    %v255 = vunpack.c.l.b16 %v215
    %v256 = vunpack.c.l.b16 %v216
    %v257 = vunpack.c.l.b16 %v217
    %v258 = vpack.c.b16 %v243, %v242
    %v259 = vpack.c.b16 %v245, %v244
    %v260 = vpack.c.b16 %v247, %v246
    %v261 = vpack.c.b16 %v249, %v248
    %v262 = vpack.c.b16 %v251, %v250
    %v263 = vpack.c.b16 %v253, %v252
    %v264 = vpack.c.b16 %v255, %v254
    %v265 = vpack.c.b16 %v257, %v256
    %274 = vmatprep.subr.bf16.mxu0 0
    %275 = vmatpush1.bf16.msra.mxu0 %v265
    %276 = vmatprep.subr.bf16.mxu0 0
    %277 = vmatpush1.bf16.msra.mxu0 %v264
    %278 = vmatprep.subr.bf16.mxu0 0
    %279 = vmatpush1.bf16.msra.mxu0 %v263
    %280 = vmatprep.subr.bf16.mxu0 0
    %281 = vmatpush1.bf16.msra.mxu0 %v262
    %282 = vmatprep.subr.bf16.mxu0 0
    %283 = vmatpush1.bf16.msra.mxu0 %v261
    %284 = vmatprep.subr.bf16.mxu0 0
    %285 = vmatpush1.bf16.msra.mxu0 %v260
    %286 = vmatprep.subr.bf16.mxu0 0
    %287 = vmatpush1.bf16.msra.mxu0 %v259
    %288 = vmatprep.subr.bf16.mxu0 0
    %289 = vmatpush1.bf16.msra.mxu0 %v258
    %290 = vmatprep.subr.bf16.mxu0 0
    %291 = vmatpush2.bf16.msra.mxu0 0
    %292 = vmatprep.subr.bf16.mxu0 0
    %293 = vmatpush2.bf16.msra.mxu0 0
    %294 = vmatprep.subr.bf16.mxu0 0
    %295 = vmatpush2.bf16.msra.mxu0 0
    %296 = vmatprep.subr.bf16.mxu0 0
    %297 = vmatpush2.bf16.msra.mxu0 0
    %298 = vmatprep.subr.bf16.mxu0 0
    %299 = vmatpush2.bf16.msra.mxu0 0
    %300 = vmatprep.subr.bf16.mxu0 0
    %301 = vmatpush2.bf16.msra.mxu0 0
    %302 = vmatprep.subr.bf16.mxu0 0
    %303 = vmatpush2.bf16.msra.mxu0 0
    %304 = vmatprep.subr.bf16.mxu0 0
    %305 = vmatpush2.bf16.msra.mxu0 0
    %306 = vmatprep.mubr.bf16.mxu0 0
    %307 = vmatmul.mubr.bf16.gmra.mxu0 %v219
    %v308 = vpop.f32.mrf.mxu0
    %v309 = vadd.f32 %v224, %v308
    %v310 = vpop.f32.mrf.mxu0
    %v311 = vpop.f32.mrf.mxu0
    %v312 = vpop.f32.mrf.mxu0
    %313 = vdwg.mxu0
    %vm314 = vcmp.gt.f32.partialorder %v309, 0.0
    %v315 = vmin.f32 %v309, 0.0
    %v316 = vmul.f32 %v315, 1.442695
    %v317 = vpow.pop %v316
    %v318 = vsub.f32 %v317, 1.0
    %v319 = vmul.f32 %v318, 1.6732632
    %v320 = vsel %vm314, %v309, %v319
    %v321 = vmul.f32 %v320, 1.050701
    %v322 = vld [vmem:[#allocation8] sm:$0xf]
    %v323 = vld [vmem:[#allocation8 + $0x4] sm:$0xf]
    %v324 = vld [vmem:[#allocation8 + $0x8] sm:$0xf]
    %v325 = vld [vmem:[#allocation8 + $0xc] sm:$0xf]
    %v326 = vld [vmem:[#allocation8 + $0x10] sm:$0xf]
    %v327 = vld [vmem:[#allocation8 + $0x14] sm:$0xf]
    %v328 = vld [vmem:[#allocation8 + $0x18] sm:$0xf]
    %v329 = vld [vmem:[#allocation8 + $0x1c] sm:$0xf]
    %v330 = vld [vmem:[#allocation8 + $0x20] sm:$0xf]
    %v331 = vld [vmem:[#allocation8 + $0x24] sm:$0xf]
    %v332 = vld [vmem:[#allocation8 + $0x28] sm:$0xf]
    %v333 = vld [vmem:[#allocation8 + $0x2c] sm:$0xf]
    %v334 = vld [vmem:[#allocation8 + $0x30] sm:$0xf]
    %v335 = vld [vmem:[#allocation8 + $0x34] sm:$0xf]
    %v336 = vld [vmem:[#allocation8 + $0x38] sm:$0xf]
    %v337 = vld [vmem:[#allocation8 + $0x3c] sm:$0xf]
    %v338 = vld [vmem:[%s6] sm:$0x1]
    %v339 = vpack.c.bf16 %v321, %v321
    %v341 = vlaneseq
    %v342 = vshrl.u32 %v341, 7
    %v343 = vsub.s32 0, %v342
    %v344 = vrot.slane %v338, %v343
    %v362 = vunpack.c.l.b16 %v322
    %v363 = vunpack.c.l.b16 %v323
    %v364 = vunpack.c.l.b16 %v324
    %v365 = vunpack.c.l.b16 %v325
    %v366 = vunpack.c.l.b16 %v326
    %v367 = vunpack.c.l.b16 %v327
    %v368 = vunpack.c.l.b16 %v328
    %v369 = vunpack.c.l.b16 %v329
    %v370 = vunpack.c.l.b16 %v330
    %v371 = vunpack.c.l.b16 %v331
    %v372 = vunpack.c.l.b16 %v332
    %v373 = vunpack.c.l.b16 %v333
    %v374 = vunpack.c.l.b16 %v334
    %v375 = vunpack.c.l.b16 %v335
    %v376 = vunpack.c.l.b16 %v336
    %v377 = vunpack.c.l.b16 %v337
    %v378 = vpack.c.b16 %v363, %v362
    %v379 = vpack.c.b16 %v365, %v364
    %v380 = vpack.c.b16 %v367, %v366
    %v381 = vpack.c.b16 %v369, %v368
    %v382 = vpack.c.b16 %v371, %v370
    %v383 = vpack.c.b16 %v373, %v372
    %v384 = vpack.c.b16 %v375, %v374
    %v385 = vpack.c.b16 %v377, %v376
    %394 = vmatprep.subr.bf16.mxu0 0
    %395 = vmatpush1.bf16.msra.mxu0 %v385
    %396 = vmatprep.subr.bf16.mxu0 0
    %397 = vmatpush1.bf16.msra.mxu0 %v384
    %398 = vmatprep.subr.bf16.mxu0 0
    %399 = vmatpush1.bf16.msra.mxu0 %v383
    %400 = vmatprep.subr.bf16.mxu0 0
    %401 = vmatpush1.bf16.msra.mxu0 %v382
    %402 = vmatprep.subr.bf16.mxu0 0
    %403 = vmatpush1.bf16.msra.mxu0 %v381
    %404 = vmatprep.subr.bf16.mxu0 0
    %405 = vmatpush1.bf16.msra.mxu0 %v380
    %406 = vmatprep.subr.bf16.mxu0 0
    %407 = vmatpush1.bf16.msra.mxu0 %v379
    %408 = vmatprep.subr.bf16.mxu0 0
    %409 = vmatpush1.bf16.msra.mxu0 %v378
    %410 = vmatprep.subr.bf16.mxu0 0
    %411 = vmatpush2.bf16.msra.mxu0 0
    %412 = vmatprep.subr.bf16.mxu0 0
    %413 = vmatpush2.bf16.msra.mxu0 0
    %414 = vmatprep.subr.bf16.mxu0 0
    %415 = vmatpush2.bf16.msra.mxu0 0
    %416 = vmatprep.subr.bf16.mxu0 0
    %417 = vmatpush2.bf16.msra.mxu0 0
    %418 = vmatprep.subr.bf16.mxu0 0
    %419 = vmatpush2.bf16.msra.mxu0 0
    %420 = vmatprep.subr.bf16.mxu0 0
    %421 = vmatpush2.bf16.msra.mxu0 0
    %422 = vmatprep.subr.bf16.mxu0 0
    %423 = vmatpush2.bf16.msra.mxu0 0
    %424 = vmatprep.subr.bf16.mxu0 0
    %425 = vmatpush2.bf16.msra.mxu0 0
    %426 = vmatprep.mubr.bf16.mxu0 0
    %427 = vmatmul.mubr.bf16.gmra.mxu0 %v339
    %v428 = vpop.f32.mrf.mxu0
    %v429 = vadd.f32 %v344, %v428
    %v430 = vpop.f32.mrf.mxu0
    %v431 = vpop.f32.mrf.mxu0
    %v432 = vpop.f32.mrf.mxu0
    %433 = vdwg.mxu0
    %vm434 = vcmp.gt.f32.partialorder %v429, 0.0
    %v435 = vmin.f32 %v429, 0.0
    %v436 = vmul.f32 %v435, 1.442695
    %v437 = vpow.pop %v436
    %v438 = vsub.f32 %v437, 1.0
    %v439 = vmul.f32 %v438, 1.6732632
    %v440 = vsel %vm434, %v429, %v439
    %v441 = vmul.f32 %v440, 1.050701
    %442 = vst [vmem:[#allocation10] sm:$0xff] %v441
    // Predicated region
    $region46: #{tpu_custom_call.1} parent=1 // pred_check
      _
    $region47: #{tpu_custom_call.1} parent=1 // pred_check_branch
      %444 = sbr.rel (0) target = $region49
    $region48: #{tpu_custom_call.1} parent=1 // pred_region
      %s446 = ssub.s32 128, 128
      %447 = vsyncadd [#allocation4], %s446
      %s449 = sshll.u32 [#allocation10], 4
      %s450 = int_to_ptr.vmem [resolvable:$true] %s449
      %452 = dma.vmem_to_hbm [thread:$0]  %s450, 128, %s7, [#allocation4]
    $region49: #{tpu_custom_call.1} parent=1 // pred_fallthru
      _
    // Predicated region
    $region50: #{tpu_custom_call.1} parent=1 // pred_check
      _
    $region51: #{tpu_custom_call.1} parent=1 // pred_check_branch
      %454 = sbr.rel (0) target = $region53
    $region52: #{tpu_custom_call.1} parent=1 // pred_region
      %455 = dma.done [#allocation4], 128
    $region53: #{tpu_custom_call.1} parent=1 // pred_fallthru
      _
    %456 = vsyncpa [#allocation3], 1
    %457 = vsyncpa [#allocation6], 1
    %458 = vsyncpa [#allocation9], 1
    %459 = vsyncpa [#allocation4], 1

</llo_original>
